<compile_context>
chip_gen: v5e
topology: v5e:2x2
jax: 0.10.0
libtpu: 0.0.40
codegen_flags: <defaults>
</compile_context>

<pallas_src>
import functools

import jax
import jax.numpy as jnp
from jax.experimental import pallas as pl
from jax.experimental.pallas import tpu as pltpu


# ----------------------------------------------------------------------------
# In-kernel helpers
# ----------------------------------------------------------------------------
def _row_mask(tile_idx, tn, total_n):
    """(tn, 1) bool mask of rows of this tile that are inside the real batch."""
    row_ids = tile_idx * tn + jax.lax.broadcasted_iota(jnp.int32, (tn, 1), 0)
    return row_ids < total_n


def _label_smooth_ce_sum(out_ref, labels_ref, rowmask, *, num_classes,
                         label_smooth_val):
    """Sum over the tile of the label-smoothed CE ('original' mode). -> (1,1)."""
    tn, c = out_ref.shape
    # In-kernel upcast (native-dtype DMA); sanitize padded rows to 0.
    logits = jnp.where(rowmask, out_ref[...].astype(jnp.float32), 0.0)
    lane = jax.lax.broadcasted_iota(jnp.int32, (tn, c), 1)

    m = jnp.max(logits, axis=-1, keepdims=True)
    s = logits - m
    lse = jnp.log(jnp.sum(jnp.exp(s), axis=-1, keepdims=True))
    # gather s at the label column (compare/select/reduce gather)
    s_label = jnp.sum(jnp.where(lane == labels_ref[...], s, 0.0),
                      axis=-1, keepdims=True)
    sum_s = jnp.sum(s, axis=-1, keepdims=True)

    eps = label_smooth_val
    # ce = -(1-eps)*logp[label] - (eps/num_classes)*sum_j logp_j
    ce = (1.0 - eps) * (lse - s_label) + (eps / num_classes) * (c * lse - sum_s)
    return jnp.sum(ce * rowmask.astype(jnp.float32), keepdims=True)   # (1, 1)


# ----------------------------------------------------------------------------
# Kernels
# ----------------------------------------------------------------------------
def _base_only_kernel(out_ref, labels_ref, loss_ref, base_acc, *,
                      total_n, num_classes, label_smooth_val, loss_weight):
    i = pl.program_id(0)
    tn = out_ref.shape[0]

    @pl.when(i == 0)
    def _():
        base_acc[...] = jnp.zeros_like(base_acc)

    rowmask = _row_mask(i, tn, total_n)
    base_acc[...] += _label_smooth_ce_sum(
        out_ref, labels_ref, rowmask,
        num_classes=num_classes, label_smooth_val=label_smooth_val)

    @pl.when(i == pl.num_programs(0) - 1)
    def _():
        loss_ref[...] = base_acc[...] * (loss_weight / total_n)


def _distill_kernel(teacher_ref, out_ref, kd_ref, labels_ref, loss_ref,
                    base_acc, dist_acc, *,
                    distillation_type, alpha, tau, label_smooth_val,
                    num_classes, loss_weight, total_n):
    i = pl.program_id(0)
    tn, c = out_ref.shape

    @pl.when(i == 0)
    def _():
        base_acc[...] = jnp.zeros_like(base_acc)
        dist_acc[...] = jnp.zeros_like(dist_acc)

    rowmask = _row_mask(i, tn, total_n)
    rowmask_f = rowmask.astype(jnp.float32)

    # ---- base criterion: LabelSmoothLoss(mode='original', mean) ------------
    base_acc[...] += _label_smooth_ce_sum(
        out_ref, labels_ref, rowmask,
        num_classes=num_classes, label_smooth_val=label_smooth_val)

    # ---- distillation term --------------------------------------------------
    teacher = jnp.where(rowmask, teacher_ref[...].astype(jnp.float32), 0.0)
    kd = jnp.where(rowmask, kd_ref[...].astype(jnp.float32), 0.0)
    lane = jax.lax.broadcasted_iota(jnp.int32, (tn, c), 1)

    if distillation_type == 'soft':
        # F.kl_div(log_softmax(kd/T), log_softmax(teacher/T),
        #          reduction='sum', log_target=True) * T*T / kd.numel()
        inv_tau = 1.0 / tau
        ts = teacher * inv_tau
        ks = kd * inv_tau

        mt = jnp.max(ts, axis=-1, keepdims=True)
        st = ts - mt
        et = jnp.exp(st)                              # single exp pass, reused
        zt = jnp.sum(et, axis=-1, keepdims=True)
        lp_t = st - jnp.log(zt)
        p_t = et / zt

        mk = jnp.max(ks, axis=-1, keepdims=True)
        sk = ks - mk
        lp_s = sk - jnp.log(jnp.sum(jnp.exp(sk), axis=-1, keepdims=True))

        kl = jnp.sum(p_t * (lp_t - lp_s), axis=-1, keepdims=True)     # (tn, 1)
        dist_acc[...] += jnp.sum(kl * rowmask_f, keepdims=True)
    else:  # 'hard'
        # F.cross_entropy(kd, teacher.argmax(dim=1))  (mean over batch)
        mk = jnp.max(kd, axis=-1, keepdims=True)
        sk = kd - mk
        lp_kd = sk - jnp.log(jnp.sum(jnp.exp(sk), axis=-1, keepdims=True))

        t_max = jnp.max(teacher, axis=-1, keepdims=True)
        # first index achieving the max (matches torch argmax tie-breaking)
        idx = jnp.min(jnp.where(teacher == t_max, lane, c),
                      axis=-1, keepdims=True)                          # (tn, 1)
        nll = -jnp.sum(jnp.where(lane == idx, lp_kd, 0.0),
                       axis=-1, keepdims=True)
        dist_acc[...] += jnp.sum(nll * rowmask_f, keepdims=True)

    @pl.when(i == pl.num_programs(0) - 1)
    def _():
        base = base_acc[...] * (loss_weight / total_n)
        if distillation_type == 'soft':
            distill = dist_acc[...] * (tau * tau / (total_n * c))
        else:
            distill = dist_acc[...] * (1.0 / total_n)
        loss_ref[...] = base * (1.0 - alpha) + distill * alpha


# ----------------------------------------------------------------------------
# Wrapper
# ----------------------------------------------------------------------------
def _pick_tile_rows(n, c, n_logit_inputs, itemsize):
    """Multiple-of-8 batch tile, double-buffered inputs kept under ~8 MiB
    (safe on v5e/v6e default scoped VMEM and on v7x's 64 MiB physical VMEM)."""
    if n <= 8:
        return n                              # full-dim block is always legal
    budget = 8 * 1024 * 1024
    per_row = max(1, n_logit_inputs * 2 * c * itemsize)   # 2 = double buffer
    tn = min(budget // per_row, 512, n)
    tn = max(8, (int(tn) // 8) * 8)
    return int(tn)


def distillation_loss(teacher_outputs, outputs, outputs_kd, labels, *,
                      distillation_type='soft', alpha=0.5, tau=1.0,
                      label_smooth_val=0.1, num_classes=100, loss_weight=1.0,
                      avg_factor=None, reduction='mean', tile_rows=None):
    assert distillation_type in ('none', 'soft', 'hard')
    if outputs_kd is None:
        raise ValueError('Know Distillation Outputs is None')
    if teacher_outputs is None and distillation_type != 'none':
        raise ValueError('Please make sure the teacher model outputs are Tensor')

    N, C = outputs.shape
    labels2d = labels.astype(jnp.int32).reshape(N, 1)
    itemsize = int(jnp.dtype(outputs.dtype).itemsize)

    n_logit_inputs = 1 if distillation_type == 'none' else 3
    tn = tile_rows if tile_rows is not None else _pick_tile_rows(
        N, C, n_logit_inputs, itemsize)
    grid = (pl.cdiv(N, tn),)

    logit_spec = pl.BlockSpec((tn, C), lambda i: (i, 0))
    label_spec = pl.BlockSpec((tn, 1), lambda i: (i, 0))
    out_spec = pl.BlockSpec((1, 1), lambda i: (0, 0))     # resident accumulator
    cparams = pltpu.CompilerParams(dimension_semantics=("arbitrary",))

    if distillation_type == 'none':
        # 'none' path: never DMA teacher / kd at all.
        kernel = functools.partial(
            _base_only_kernel, total_n=N, num_classes=num_classes,
            label_smooth_val=label_smooth_val, loss_weight=loss_weight)
        cost = pl.CostEstimate(
            flops=int(8 * N * C),
            transcendentals=int(N * C),
            bytes_accessed=int(N * C * itemsize + N * 4 + 4))
        loss = pl.pallas_call(
            kernel,
            grid=grid,
            out_shape=jax.ShapeDtypeStruct((1, 1), jnp.float32),
            in_specs=[logit_spec, label_spec],
            out_specs=out_spec,
            scratch_shapes=[pltpu.VMEM((1, 1), jnp.float32)],
            compiler_params=cparams,
            cost_estimate=cost,
        )(outputs, labels2d)[0, 0]
    else:
        kernel = functools.partial(
            _distill_kernel, distillation_type=distillation_type, alpha=alpha,
            tau=tau, label_smooth_val=label_smooth_val,
            num_classes=num_classes, loss_weight=loss_weight, total_n=N)
        n_exp = 3 if distillation_type == 'soft' else 2
        cost = pl.CostEstimate(
            flops=int(20 * N * C),
            transcendentals=int(n_exp * N * C),
            bytes_accessed=int(3 * N * C * itemsize + N * 4 + 4))
        loss = pl.pallas_call(
            kernel,
            grid=grid,
            out_shape=jax.ShapeDtypeStruct((1, 1), jnp.float32),
            in_specs=[logit_spec, logit_spec, logit_spec, label_spec],
            out_specs=out_spec,
            scratch_shapes=[pltpu.VMEM((1, 1), jnp.float32),
                            pltpu.VMEM((1, 1), jnp.float32)],
            compiler_params=cparams,
            cost_estimate=cost,
        )(teacher_outputs, outputs, outputs_kd, labels2d)[0, 0]

    # weight_reduce_loss glue (weight=1.0, scalar loss): 'mean'/'sum'/'none' on
    # a scalar are identity unless avg_factor is given.
    if reduction == 'mean' and avg_factor is not None:
        loss = loss / avg_factor
    return loss


# ----------------------------------------------------------------------------
# Pure-JAX reference
# ----------------------------------------------------------------------------
def _reference(teacher, out, kd, labels, *, distillation_type, alpha, tau,
               label_smooth_val, num_classes, loss_weight):
    teacher = teacher.astype(jnp.float32)
    out = out.astype(jnp.float32)
    kd = kd.astype(jnp.float32)
    logp = jax.nn.log_softmax(out, axis=-1)
    onehot = jax.nn.one_hot(labels, num_classes, dtype=jnp.float32)
    smooth = onehot * (1.0 - label_smooth_val) + label_smooth_val / num_classes
    base = loss_weight * jnp.mean(-jnp.sum(smooth * logp, axis=-1))
    if distillation_type == 'none':
        return base
    if distillation_type == 'soft':
        lp_s = jax.nn.log_softmax(kd / tau, axis=-1)
        lp_t = jax.nn.log_softmax(teacher / tau, axis=-1)
        distill = jnp.sum(jnp.exp(lp_t) * (lp_t - lp_s)) * (tau * tau) / kd.size
    else:
        lp_kd = jax.nn.log_softmax(kd, axis=-1)
        idx = jnp.argmax(teacher, axis=-1)
        distill = jnp.mean(-jnp.take_along_axis(lp_kd, idx[:, None], axis=-1))
    return base * (1.0 - alpha) + distill * alpha


if __name__ == "__main__":
    N, C = 20, 100  # num_classes=100 per the module's default loss config
    key = jax.random.PRNGKey(0)
    k1, k2, k3, k4 = jax.random.split(key, 4)
    teacher = jax.random.normal(k1, (N, C), dtype=jnp.float32)
    outputs = jax.random.normal(k2, (N, C), dtype=jnp.float32)
    outputs_kd = jax.random.normal(k3, (N, C), dtype=jnp.float32)
    labels = jax.random.randint(k4, (N,), 0, C, dtype=jnp.int32)

    ok = True
    # Multi-tile grid (tile_rows=8 -> 3 tiles, last one partial/masked).
    for dt in ('none', 'soft', 'hard'):
        got = distillation_loss(teacher, outputs, outputs_kd, labels,
                                distillation_type=dt, alpha=0.5, tau=1.0,
                                num_classes=C, tile_rows=8)
        got = jax.block_until_ready(got)
        want = _reference(teacher, outputs, outputs_kd, labels,
                          distillation_type=dt, alpha=0.5, tau=1.0,
                          label_smooth_val=0.1, num_classes=C, loss_weight=1.0)
        if not jnp.allclose(got, want, rtol=1e-5, atol=1e-5):
            ok = False
            print(f"mismatch[{dt}]: kernel={got} ref={want}")

    # bf16 inputs stay bf16 on the way into the kernel (upcast happens inside).
    t16 = teacher.astype(jnp.bfloat16)
    o16 = outputs.astype(jnp.bfloat16)
    k16 = outputs_kd.astype(jnp.bfloat16)
    got16 = distillation_loss(t16, o16, k16, labels, distillation_type='soft',
                              alpha=0.5, tau=1.0, num_classes=C)
    got16 = jax.block_until_ready(got16)
    want16 = _reference(t16, o16, k16, labels, distillation_type='soft',
                        alpha=0.5, tau=1.0, label_smooth_val=0.1,
                        num_classes=C, loss_weight=1.0)
    if not jnp.allclose(got16, want16, rtol=1e-4, atol=1e-4):
        ok = False
        print(f"mismatch[bf16 soft]: kernel={got16} ref={want16}")

    if ok:
        print("KERNEL_OK")
</pallas_src>

<mosaic_0001>
module attributes {stable_mosaic.version = 11 : i64} {
  func.func @_base_only_kernel(%arg0: i32, %arg1: memref<8x100xf32, #tpu.memory_space<vmem>>, %arg2: memref<8x1xi32, #tpu.memory_space<vmem>>, %arg3: memref<1x1xf32, #tpu.memory_space<vmem>>, %arg4: memref<1x1xf32, #tpu.memory_space<vmem>>) attributes {dimension_semantics = [#tpu.dimension_semantics<arbitrary>], iteration_bounds = array<i64: 3>, scalar_prefetch = 0 : i64, scratch_operands = 1 : i64, tpu.core_type = #tpu.core_type<tc>, window_params = [{transform_indices = @transform_0, window_bounds = array<i64: 8, 100>}, {transform_indices = @transform_1, window_bounds = array<i64: 8, 1>}, {pipeline_mode = #tpu.pipeline_mode<synchronous>, transform_indices = @transform_2, window_bounds = array<i64: 1, 1>}]} {
    %c0_i32 = arith.constant 0 : i32
    %0 = arith.cmpi eq, %arg0, %c0_i32 : i32
    %1 = arith.extui %0 : i1 to i32
    %c0_i32_0 = arith.constant 0 : i32
    %2 = arith.cmpi ne, %1, %c0_i32_0 : i32
    scf.if %2 {
      %cst_18 = arith.constant 0.000000e+00 : f32
      %55 = vector.broadcast %cst_18 : f32 to vector<1x1xf32>
      %c0_19 = arith.constant 0 : index
      %c0_20 = arith.constant 0 : index
      %56 = vector.load %arg4[%c0_19, %c0_20] : memref<1x1xf32, #tpu.memory_space<vmem>>, vector<1x1xf32>
      tpu.vector_store %arg4[%c0_19, %c0_20], %55 {strides = array<i32>} : memref<1x1xf32, #tpu.memory_space<vmem>>, vector<1x1xf32>,
    } else {
    }
    %c8_i32 = arith.constant 8 : i32
    %3 = arith.muli %arg0, %c8_i32 : i32
    %4 = tpu.iota {dimensions = array<i32: 0>} : vector<8x1xi32>
    %5 = vector.broadcast %3 : i32 to vector<8x1xi32>
    %6 = arith.addi %5, %4 : vector<8x1xi32>
    %c20_i32 = arith.constant 20 : i32
    %7 = vector.broadcast %c20_i32 : i32 to vector<8x1xi32>
    %8 = arith.cmpi slt, %6, %7 : vector<8x1xi32>
    %c0 = arith.constant 0 : index
    %c0_1 = arith.constant 0 : index
    %9 = vector.load %arg4[%c0, %c0_1] : memref<1x1xf32, #tpu.memory_space<vmem>>, vector<1x1xf32>
    %c0_2 = arith.constant 0 : index
    %c0_3 = arith.constant 0 : index
    %10 = vector.load %arg1[%c0_2, %c0_3] : memref<8x100xf32, #tpu.memory_space<vmem>>, vector<8x100xf32>
    %cst = arith.constant 0.000000e+00 : f32
    %11 = vector.shape_cast %8 : vector<8x1xi1> to vector<8x1xi1>
    %12 = vector.broadcast %11 : vector<8x1xi1> to vector<8x100xi1>
    %13 = vector.broadcast %cst : f32 to vector<8x100xf32>
    %14 = arith.select %12, %10, %13 : vector<8x100xi1>, vector<8x100xf32>
    %15 = tpu.iota {dimensions = array<i32: 1>} : vector<8x100xi32>
    %cst_4 = arith.constant dense<0xFF800000> : vector<8xf32>
    %16 = vector.multi_reduction <maximumf>, %14, %cst_4 [1] : vector<8x100xf32> to vector<8xf32>
    %17 = vector.shape_cast %16 : vector<8xf32> to vector<8x1xf32>
    %18 = vector.broadcast %17 : vector<8x1xf32> to vector<8x100xf32>
    %19 = arith.subf %14, %18 : vector<8x100xf32>
    %20 = math.exp %19 : vector<8x100xf32>
    %cst_5 = arith.constant dense<0.000000e+00> : vector<8xf32>
    %21 = vector.multi_reduction <add>, %20, %cst_5 [1] : vector<8x100xf32> to vector<8xf32>
    %22 = vector.shape_cast %21 : vector<8xf32> to vector<8x1xf32>
    %23 = math.log %22 : vector<8x1xf32>
    %c0_6 = arith.constant 0 : index
    %c0_7 = arith.constant 0 : index
    %24 = vector.load %arg2[%c0_6, %c0_7] : memref<8x1xi32, #tpu.memory_space<vmem>>, vector<8x1xi32>
    %25 = vector.broadcast %24 : vector<8x1xi32> to vector<8x100xi32>
    %26 = arith.cmpi eq, %15, %25 : vector<8x100xi32>
    %cst_8 = arith.constant 0.000000e+00 : f32
    %27 = vector.broadcast %cst_8 : f32 to vector<8x100xf32>
    %28 = arith.select %26, %19, %27 : vector<8x100xi1>, vector<8x100xf32>
    %cst_9 = arith.constant dense<0.000000e+00> : vector<8xf32>
    %29 = vector.multi_reduction <add>, %28, %cst_9 [1] : vector<8x100xf32> to vector<8xf32>
    %30 = vector.shape_cast %29 : vector<8xf32> to vector<8x1xf32>
    %cst_10 = arith.constant dense<0.000000e+00> : vector<8xf32>
    %31 = vector.multi_reduction <add>, %19, %cst_10 [1] : vector<8x100xf32> to vector<8xf32>
    %32 = vector.shape_cast %31 : vector<8xf32> to vector<8x1xf32>
    %33 = arith.subf %23, %30 : vector<8x1xf32>
    %cst_11 = arith.constant 0.899999976 : f32
    %34 = vector.broadcast %cst_11 : f32 to vector<8x1xf32>
    %35 = arith.mulf %34, %33 : vector<8x1xf32>
    %cst_12 = arith.constant 1.000000e+02 : f32
    %36 = vector.broadcast %cst_12 : f32 to vector<8x1xf32>
    %37 = arith.mulf %36, %23 : vector<8x1xf32>
    %38 = arith.subf %37, %32 : vector<8x1xf32>
    %cst_13 = arith.constant 1.000000e-03 : f32
    %39 = vector.broadcast %cst_13 : f32 to vector<8x1xf32>
    %40 = arith.mulf %39, %38 : vector<8x1xf32>
    %41 = arith.addf %35, %40 : vector<8x1xf32>
    %42 = arith.extui %8 : vector<8x1xi1> to vector<8x1xi32>
    %43 = arith.sitofp %42 : vector<8x1xi32> to vector<8x1xf32>
    %44 = arith.mulf %41, %43 : vector<8x1xf32>
    %45 = vector.shape_cast %44 : vector<8x1xf32> to vector<1x8x1xf32>
    %cst_14 = arith.constant dense<0.000000e+00> : vector<1xf32>
    %46 = vector.multi_reduction <add>, %45, %cst_14 [1, 2] : vector<1x8x1xf32> to vector<1xf32>
    %47 = vector.shape_cast %46 : vector<1xf32> to vector<1x1x1xf32>
    %48 = vector.extract %47[0, 0, 0] : f32 from vector<1x1x1xf32>
    %49 = vector.broadcast %48 : f32 to vector<1x1xf32>
    %50 = arith.addf %9, %49 : vector<1x1xf32>
    %c0_15 = arith.constant 0 : index
    %c0_16 = arith.constant 0 : index
    %51 = vector.load %arg4[%c0_15, %c0_16] : memref<1x1xf32, #tpu.memory_space<vmem>>, vector<1x1xf32>
    tpu.vector_store %arg4[%c0_15, %c0_16], %50 {strides = array<i32>} : memref<1x1xf32, #tpu.memory_space<vmem>>, vector<1x1xf32>,
    %c2_i32 = arith.constant 2 : i32
    %52 = arith.cmpi eq, %arg0, %c2_i32 : i32
    %53 = arith.extui %52 : i1 to i32
    %c0_i32_17 = arith.constant 0 : i32
    %54 = arith.cmpi ne, %53, %c0_i32_17 : i32
    scf.if %54 {
      %c0_18 = arith.constant 0 : index
      %c0_19 = arith.constant 0 : index
      %55 = vector.load %arg4[%c0_18, %c0_19] : memref<1x1xf32, #tpu.memory_space<vmem>>, vector<1x1xf32>
      %cst_20 = arith.constant 5.000000e-02 : f32
      %56 = vector.broadcast %cst_20 : f32 to vector<1x1xf32>
      %57 = arith.mulf %55, %56 : vector<1x1xf32>
      %c0_21 = arith.constant 0 : index
      %c0_22 = arith.constant 0 : index
      %58 = vector.load %arg3[%c0_21, %c0_22] : memref<1x1xf32, #tpu.memory_space<vmem>>, vector<1x1xf32>
      tpu.vector_store %arg3[%c0_21, %c0_22], %57 {strides = array<i32>} : memref<1x1xf32, #tpu.memory_space<vmem>>, vector<1x1xf32>,
    } else {
    }
    return
  }
  func.func @transform_0(%arg0: i32) -> (i32, i32) {
    %c0_i32 = arith.constant 0 : i32
    %c0_i32_0 = arith.constant 0 : i32
    return %arg0, %c0_i32 : i32, i32
  }
  func.func @transform_1(%arg0: i32) -> (i32, i32) {
    %c0_i32 = arith.constant 0 : i32
    %c0_i32_0 = arith.constant 0 : i32
    return %arg0, %c0_i32 : i32, i32
  }
  func.func @transform_2(%arg0: i32) -> (i32, i32) {
    %c0_i32 = arith.constant 0 : i32
    %c0_i32_0 = arith.constant 0 : i32
    %c0_i32_1 = arith.constant 0 : i32
    return %c0_i32, %c0_i32_0 : i32, i32
  }
}

</mosaic_0001>

<llo_original>
// kernel: tpu_custom_call.1
$region0: #{tpu_custom_call.1}
  #allocation0 [shape = 'u32[]', space=smem, size = 0x4, offset = 0x4, fixed_abs, tag = 'smem constant byte address 0x4 - core index']
  #allocation1 [shape = 'u32[72,128]{1,0:T(1,128)}', space=vmem, size = 0x9000, scoped, tag = 'internal scratch']
  #allocation2 [shape = 'f32[1,1]{1,0:T(1,128)}', space=vmem, size = 0x200, scoped, tag = 'scratch operand']
  %s0 = inlined_call_operand.vmem [shape: f32[20,100], index: 0, kind: input, shape index: {}]
  %s1 = inlined_call_operand.vmem [shape: s32[20,1], index: 1, kind: input, shape index: {}]
  %s2 = inlined_call_operand.hbm [shape: f32[1,1], index: 2, kind: output, shape index: {}]
  %s3 = sld [smem:[#allocation0]]
  $region49: #{tpu_custom_call.1} parent=0
    _
  %s5 = ssub.s32 1, %s3
  %s6 = scalar_select 0, %s5, %s3
  $region1: #{tpu_custom_call.1} parent=0
    #allocation3 [shape = 'u8[512]{0}', space=vmem, size = 0x400, scoped, tag = 'output window, operand 0, single buffered']
    #allocation4 [shape = 's32[2]{0}', space=sflag, size = 0x8, scoped, tag = 'scoped memory for tpu_custom_call.1']
    %7 = vsyncpa [#allocation4], 0
    loop: start=0, step=1, limit=5
    $region2: #{tpu_custom_call.1} parent=1 // loop_pre_header
      _
    $region3: #{tpu_custom_call.1} parent=1 // loop_header
      %s9 = sphi 0, %s13
      %p10 = scmp.ge.s32.totalorder %s9, 5
      %s19 = sphi 0, %s21
      %s22 = sphi 0, %s19
      %s23 = sphi 0, %s22
      %s39 = sphi 0, %s23
      %s45 = sphi 0, %s47
      %s48 = sphi 0, %s45
      %s49 = sphi 0, %s48
      %s65 = sphi 0, %s49
      %s69 = sphi 0, %s69
      %s71 = sphi 0, %s69
      %s72 = sphi 0, %s71
      %s86 = sphi 0, %s72
    $region4: #{tpu_custom_call.1} parent=1 // loop_header_branch
      %12 = sbr.rel (%p10) target = $region8
    $region5: #{tpu_custom_call.1} parent=1 // loop_body
      %s14 = ssub.s32 %s9, 1
      %s15 = ssub.s32 %s9, 2
      %s16 = sadd.s32 %s9, 1
      %s17 = ssub.s32 %s9, %s16
      %p18 = scmp.eq.s32.totalorder %s17, 0
      %s20 = sadd.s32 %s19, 1
      %s21 = scalar_select %p18, %s19, %s20
      %p24 = pneg %p18
      %p25 = scmp.eq.s32.totalorder %s9, 2
      %p26 = por %p24, %p25
      %p27 = scmp.ne.s32.totalorder %s19, %s22
      %p28 = scmp.eq.s32.totalorder %s9, 0
      %p29 = por %p27, %p28
      %p30 = scmp.ne.s32.totalorder %s19, %s22
      %p31 = scmp.eq.s32.totalorder %s14, 2
      %p32 = por %p30, %p31
      %p33 = scmp.ne.s32.totalorder %s22, %s23
      %p34 = scmp.eq.s32.totalorder %s14, 0
      %p35 = por %p33, %p34
      %p36 = scmp.ne.s32.totalorder %s22, %s23
      %p37 = scmp.eq.s32.totalorder %s15, 2
      %p38 = por %p36, %p37
      %p40 = scmp.ne.s32.totalorder %s23, %s39
      %p41 = scmp.eq.s32.totalorder %s15, 0
      %p42 = por %p40, %p41
      %s43 = ssub.s32 %s9, %s16
      %p44 = scmp.eq.s32.totalorder %s43, 0
      %s46 = sadd.s32 %s45, 1
      %s47 = scalar_select %p44, %s45, %s46
      %p50 = pneg %p44
      %p51 = scmp.eq.s32.totalorder %s9, 2
      %p52 = por %p50, %p51
      %p53 = scmp.ne.s32.totalorder %s45, %s48
      %p54 = scmp.eq.s32.totalorder %s9, 0
      %p55 = por %p53, %p54
      %p56 = scmp.ne.s32.totalorder %s45, %s48
      %p57 = scmp.eq.s32.totalorder %s14, 2
      %p58 = por %p56, %p57
      %p59 = scmp.ne.s32.totalorder %s48, %s49
      %p60 = scmp.eq.s32.totalorder %s14, 0
      %p61 = por %p59, %p60
      %p62 = scmp.ne.s32.totalorder %s48, %s49
      %p63 = scmp.eq.s32.totalorder %s15, 2
      %p64 = por %p62, %p63
      %p66 = scmp.ne.s32.totalorder %s49, %s65
      %p67 = scmp.eq.s32.totalorder %s15, 0
      %p68 = por %p66, %p67
      %s70 = sadd.s32 %s69, 1
      %p73 = scmp.eq.s32.totalorder %s9, 2
      %p74 = scmp.ne.s32.totalorder %s69, %s71
      %p75 = scmp.eq.s32.totalorder %s9, 0
      %p76 = por %p74, %p75
      %p77 = scmp.ne.s32.totalorder %s69, %s71
      %p78 = scmp.eq.s32.totalorder %s14, 2
      %p79 = por %p77, %p78
      %p80 = scmp.ne.s32.totalorder %s71, %s72
      %p81 = scmp.eq.s32.totalorder %s14, 0
      %p82 = por %p80, %p81
      %p83 = scmp.ne.s32.totalorder %s71, %s72
      %p84 = scmp.eq.s32.totalorder %s15, 2
      %p85 = por %p83, %p84
      %p87 = scmp.ne.s32.totalorder %s72, %s86
      %p88 = scmp.eq.s32.totalorder %s15, 0
      %p89 = por %p87, %p88
      %p90 = scmp.le.s32.totalorder 1, %s9
      %p91 = scmp.lt.s32.totalorder %s9, 4
      %p92 = pnand %p90, %p91
      %p93 = pneg %p92
      // Predicated region
      $region9: #{tpu_custom_call.1} parent=5 // pred_check
        _
      $region10: #{tpu_custom_call.1} parent=5 // pred_check_branch
        %95 = sbr.rel (%p92) target = $region12
      $region11: #{tpu_custom_call.1} parent=5 // pred_region
        %s96 = ssub.s32 %s9, 1
      $region12: #{tpu_custom_call.1} parent=5 // pred_fallthru
        _
      %p97 = scmp.lt.s32.totalorder %s9, 3
      // Predicated region
      $region13: #{tpu_custom_call.1} parent=5 // pred_check
        %p98 = pneg %p97
      $region14: #{tpu_custom_call.1} parent=5 // pred_check_branch
        %100 = sbr.rel (%p98) target = $region16
      $region15: #{tpu_custom_call.1} parent=5 // pred_region
        // Predicated region
        $region17: #{tpu_custom_call.1} parent=15 // pred_check
          %p101 = pneg %p29
        $region18: #{tpu_custom_call.1} parent=15 // pred_check_branch
          %103 = sbr.rel (%p101) target = $region20
        $region19: #{tpu_custom_call.1} parent=15 // pred_region
          %p104 = scmp.lt.s32.totalorder %s9, 2
          %s105 = scalar_select %p104, %s9, 2
          %s106 = smul.addr %s105, 8
          %s107 = scalar_lea.vmem %s0, %s106
        $region20: #{tpu_custom_call.1} parent=15 // pred_fallthru
          _
        // Predicated region
        $region21: #{tpu_custom_call.1} parent=15 // pred_check
          %p108 = pneg %p55
        $region22: #{tpu_custom_call.1} parent=15 // pred_check_branch
          %110 = sbr.rel (%p108) target = $region24
        $region23: #{tpu_custom_call.1} parent=15 // pred_region
          %p111 = scmp.lt.s32.totalorder %s9, 2
          %s112 = scalar_select %p111, %s9, 2
          %s113 = smul.addr %s112, 8
          %s114 = scalar_lea.vmem %s1, %s113
        $region24: #{tpu_custom_call.1} parent=15 // pred_fallthru
          _
      $region16: #{tpu_custom_call.1} parent=5 // pred_fallthru
        _
      %p115 = scmp.le.s32.totalorder 1, %s9
      %p116 = scmp.lt.s32.totalorder %s9, 4
      %p117 = pnand %p115, %p116
      %p118 = pneg %p117
      // Predicated region
      $region25: #{tpu_custom_call.1} parent=5 // pred_check
        _
      $region26: #{tpu_custom_call.1} parent=5 // pred_check_branch
        %120 = sbr.rel (%p117) target = $region28
      $region27: #{tpu_custom_call.1} parent=5 // pred_region
        %s121 = ssub.s32 %s9, 1
        %p122 = scmp.lt.s32.totalorder %s14, 2
        %s123 = scalar_select %p122, %s14, 2
        %s124 = smul.addr %s123, 8
        %s125 = scalar_lea.vmem %s0, %s124
        %p126 = pneg %p35
        %p127 = pneg %p32
        %p128 = scmp.lt.s32.totalorder %s14, 2
        %s129 = scalar_select %p128, %s14, 2
        %s130 = smul.addr %s129, 8
        %s131 = scalar_lea.vmem %s1, %s130
        %p132 = pneg %p61
        %p133 = pneg %p58
        %p134 = pneg %p82
        %p135 = pneg %p79
        %p136 = scmp.lt.s32.totalorder %s14, 2
        %s137 = scalar_select %p136, %s14, 2
        %s138 = smul.addr %s137, 8
        %s139 = scalar_lea.vmem %s0, %s138
        %p140 = scmp.lt.s32.totalorder %s14, 2
        %s141 = scalar_select %p140, %s14, 2
        %s142 = smul.addr %s141, 8
        %s143 = scalar_lea.vmem %s1, %s142
        %p144 = scmp.eq.s32.totalorder %s14, 0
        // Predicated region
        $region29: #{tpu_custom_call.1} parent=27 // pred_check
          %p145 = pneg %p144
        $region30: #{tpu_custom_call.1} parent=27 // pred_check_branch
          %147 = sbr.rel (%p145) target = $region32
        $region31: #{tpu_custom_call.1} parent=27 // pred_region
          %vm148 = vcmask 0
          %149 = vst.msk [vmem:[#allocation2] sm:$0x1] %vm148, 0.0
        $region32: #{tpu_custom_call.1} parent=27 // pred_fallthru
          _
        %s150 = smul.u32 %s14, 8
        %v151 = vlaneseq
        %v152 = vshrl.u32 %v151, 7
        %v153 = vstv %s150
        %v154 = vadd.s32 %v153, %v152
        %vm155 = vcmp.lt.s32.totalorder %v154, 20
        %v156 = vld [vmem:[#allocation2] sm:$0x1]
        %v157 = vld [vmem:[%s139] sm:$0xff]
        %v158 = vsel %vm155, 1, 0
        %vm159 = vcmp.eq.s32.totalorder %v158, 1
        %v160 = vsel %vm159, %v157, 0.0
        %v161 = vlaneseq
        %v162 = vand.u32 %v161, 127
        %vm163 = vcmask 818176
        %v164 = vsel %vm163, %v160, -inf
        %165 = vmax.xlane.f32.xlu0 %v164
        %v166 = vpop.xlane.xlu0 %165
        %v167 = vsub.f32 %v160, %v166
        %v168 = vmul.f32 %v167, 1.442695
        %v169 = vpow.pop %v168
        %v170 = vsel %vm163, %v169, 0.0
        %171 = vadd.xlane.f32.xlu0 %v170
        %v172 = vpop.xlane.xlu0 %171
        %v173 = vlog2.pop %v172
        %v174 = vmul.f32 %v173, 0.6931472
        %v175 = vld [vmem:[%s143] sm:$0xff]
        %176 = vset.pattern.permute.xlu0 0
        %177 = vperm.xlu0 %176, %v175
        %v178 = vpop.permute.xlu0 %177
        %vm179 = vcmp.eq.s32.totalorder %v162, %v178
        %v180 = vsel %vm179, %v167, 0.0
        %v181 = vsel %vm163, %v180, 0.0
        %182 = vadd.xlane.f32.xlu0 %v181
        %v183 = vpop.xlane.xlu0 %182
        %v184 = vsel %vm163, %v167, 0.0
        %185 = vadd.xlane.f32.xlu0 %v184
        %v186 = vpop.xlane.xlu0 %185
        %v187 = vsub.f32 %v174, %v183
        %v188 = vmul.f32 %v187, 0.9
        %v189 = vmul.f32 %v174, 100.0
        %v190 = vsub.f32 %v189, %v186
        %v191 = vmul.f32 %v190, 0.001
        %v192 = vadd.f32 %v188, %v191
        %v193 = vcvt.s32.f32 %v158
        %v194 = vmul.f32 %v192, %v193
        %vm195 = vcmask 7168
        %v196 = vsel %vm195, %v194, 0.0
        %197 = vadd.xlane.f32.xlu0 %v196
        %v198 = vpop.xlane.xlu0 %197
        %v199 = vrot.slane %v198, 4
        %v200 = vadd.f32 %v198, %v199
        %v201 = vrot.slane %v200, 2
        %v202 = vadd.f32 %v200, %v201
        %v203 = vrot.slane %v202, 1
        %v204 = vadd.f32 %v202, %v203
        %s205 = vtos %v204
        %v206 = vstv %s205
        %v207 = vadd.f32 %v156, %v206
        %vm208 = vcmask 0
        %209 = vst.msk [vmem:[#allocation2] sm:$0x1] %vm208, %v207
        %p210 = scmp.eq.s32.totalorder %s14, 2
        // Predicated region
        $region33: #{tpu_custom_call.1} parent=27 // pred_check
          %p211 = pneg %p210
        $region34: #{tpu_custom_call.1} parent=27 // pred_check_branch
          %213 = sbr.rel (%p211) target = $region36
        $region35: #{tpu_custom_call.1} parent=27 // pred_region
          %v214 = vld [vmem:[#allocation2] sm:$0x1]
          %v215 = vmul.f32 %v214, 0.05
          %216 = vst.msk [vmem:[#allocation3] sm:$0x1] %vm208, %v215
        $region36: #{tpu_custom_call.1} parent=27 // pred_fallthru
          _
        // Predicated region
        $region37: #{tpu_custom_call.1} parent=27 // pred_check
          %p217 = pneg %p79
        $region38: #{tpu_custom_call.1} parent=27 // pred_check_branch
          %219 = sbr.rel (%p217) target = $region40
        $region39: #{tpu_custom_call.1} parent=27 // pred_region
          %221 = vsyncadd [#allocation4], 0
          %s223 = sshll.u32 [#allocation3], 4
          %s224 = int_to_ptr.vmem [resolvable:$true] %s223
          %s225 = sshll.u32 %s2, 4
          %s226 = int_to_ptr.hbm [resolvable:$true] %s225
          %228 = dma.vmem_to_hbm [thread:$0]  %s224, 16, %s226, [#allocation4]
        $region40: #{tpu_custom_call.1} parent=27 // pred_fallthru
          _
        // Predicated region
        $region41: #{tpu_custom_call.1} parent=27 // pred_check
          %p229 = pneg %p79
        $region42: #{tpu_custom_call.1} parent=27 // pred_check_branch
          %231 = sbr.rel (%p229) target = $region44
        $region43: #{tpu_custom_call.1} parent=27 // pred_region
          %233 = dma.done [#allocation4], 16
        $region44: #{tpu_custom_call.1} parent=27 // pred_fallthru
          _
      $region28: #{tpu_custom_call.1} parent=5 // pred_fallthru
        _
      %p234 = scmp.le.s32.totalorder 2, %s9
      // Predicated region
      $region45: #{tpu_custom_call.1} parent=5 // pred_check
        %p235 = pneg %p234
      $region46: #{tpu_custom_call.1} parent=5 // pred_check_branch
        %237 = sbr.rel (%p235) target = $region48
      $region47: #{tpu_custom_call.1} parent=5 // pred_region
        %s238 = ssub.s32 %s9, 2
      $region48: #{tpu_custom_call.1} parent=5 // pred_fallthru
        _
    $region6: #{tpu_custom_call.1} parent=1 // loop_footer
      %s13 = sadd.s32 1, %s9
    $region7: #{tpu_custom_call.1} parent=1 // loop_footer_branch
      %8 = sbr.rel target = $region3
    $region8: #{tpu_custom_call.1} parent=1 // loop_exit
      _
    %239 = vsyncpa [#allocation4], 1
    %s240 = scalar_lea.sflag [#allocation4], 1
    %241 = vsyncpa %s240, 1

</llo_original>
